<compile_context>
chip_gen: v6e
topology: v6e:2x2x1
jax: 0.10.0
libtpu: 0.0.40
codegen_flags: <defaults>
</compile_context>

<pallas_src>
import numpy as np
import jax
import jax.numpy as jnp
from jax.experimental import pallas as pl
from jax.experimental.pallas import tpu as pltpu

FILTER_SIZE = 5
STRIDE = 2
PAD = (FILTER_SIZE - 2) // 2          # = 1
EPS = 1e-12
# np.hanning(5)[1:-1] = [0.5, 1.0, 0.5]; outer(a, a)/sum(outer) is separable with
# exact 1-D taps [0.25, 0.5, 0.25] along each axis.
W_SIDE = 0.25
W_CENTER = 0.5


def make_l2pool_filter(channels: int) -> jnp.ndarray:
    """Same buffer construction as the PyTorch __init__ (used by the reference)."""
    a = np.hanning(FILTER_SIZE)[1:-1]
    g = a[:, None] * a[None, :]
    g = g / g.sum()
    filt = np.broadcast_to(g[None, None], (channels, 1, 3, 3)).astype(np.float32)
    return jnp.asarray(filt)


def _hpass(center, right):
    """Horizontal taps [0.25, 0.5, 0.25]: 0.5*sq[2j] + 0.25*sq[2j+1] + 0.25*sq[2j-1].

    `center` / `right` are the even / odd column phases of one row phase.  The left
    tap of output column j is the right tap of column j-1: an XLU roll along the
    sublane (Wo) dim, masked to zero at column 0 (conv zero padding).
    """
    center = center.astype(jnp.float32)
    right = right.astype(jnp.float32)
    c_sq = center * center
    r_sq = W_SIDE * (right * right)
    sub = r_sq.ndim - 2                                     # sublane (Wo) axis
    col = jax.lax.broadcasted_iota(jnp.int32, r_sq.shape, sub)
    left = jnp.where(col == 0, 0.0, pltpu.roll(r_sq, shift=1, axis=sub))
    return W_CENTER * c_sq + r_sq + left


def _l2pool_kernel(x_ref, halo_ref, o_ref):
    # x_ref:    (THo, 4, Wo, PB)   phase axis index = 2*row_phase + col_phase
    # halo_ref: (2, Wo, PB)        odd row just above this H tile (both col phases)
    # o_ref:    (THo, Wo, PB)
    h_even = _hpass(x_ref[:, 0, :, :], x_ref[:, 1, :, :])   # rows 2R
    h_odd = _hpass(x_ref[:, 2, :, :], x_ref[:, 3, :, :])    # rows 2R+1

    # Row above this tile (global row 2*h*THo - 1); tile 0 sees the conv zero pad.
    halo_h = _hpass(halo_ref[0, :, :], halo_ref[1, :, :])
    halo_h = halo_h * (pl.program_id(0) > 0).astype(jnp.float32)

    tho = h_even.shape[0]
    if tho > 1:
        h_odd_prev = jnp.concatenate([halo_h[None], h_odd[:-1]], axis=0)
    else:
        h_odd_prev = halo_h[None]

    out = W_CENTER * h_even + W_SIDE * (h_odd + h_odd_prev)
    o_ref[...] = jnp.sqrt(out + EPS).astype(o_ref.dtype)    # single store, no scratch


def _vmem_capacity_bytes() -> int:
    try:
        return int(pltpu.get_tpu_info().vmem_capacity_bytes)
    except Exception:
        return 64 * 2**20           # conservative default (v7x per-TensorCore VMEM)


def _step_vmem_bytes(tho, wo, pb, itemsize) -> int:
    """Conservative per-grid-step VMEM footprint (double-buffered blocks + f32 temps)."""
    inp = 2 * tho * 4 * wo * pb * itemsize       # main input block
    halo = 2 * 2 * wo * pb * itemsize            # halo-row block
    out = 2 * tho * wo * pb * itemsize           # output block
    tmp = (10 * tho + 6) * wo * pb * 4           # f32 intermediates (upper bound)
    return inp + halo + out + tmp


def _pick_tiles(P, Ho, Wo, itemsize, budget):
    """Largest (plane_block, h_tile) whose per-step footprint fits the budget."""
    if P % 128 == 0:
        pb_cands = [pb for pb in (512, 256, 128) if P % pb == 0] or [128]
    else:
        pb_cands = [P]               # lane rule: non-multiple-of-128 must be full extent
    h_divs = [d for d in range(Ho, 0, -1) if Ho % d == 0]
    # First pass prefers reasonably tall H tiles (amortizes halo + per-step overhead).
    for min_tho in (min(Ho, 8), 1):
        for pb in pb_cands:
            for tho in h_divs:
                if tho < min_tho:
                    break
                if _step_vmem_bytes(tho, Wo, pb, itemsize) <= budget:
                    return pb, tho
    # Nothing fits: smallest legal tile; the compiler will fail loudly if it is still
    # too large (would need W tiling).
    return pb_cands[-1], 1


def l2pooling(x: jnp.ndarray) -> jnp.ndarray:
    """Pallas L2pooling forward. x: (N, C, H, W) -> (N, C, ceil(H/2), ceil(W/2))."""
    N, C, H, W = x.shape
    itemsize = jnp.dtype(x.dtype).itemsize

    # One zero row/col on the bottom/right for odd spatial dims reproduces the conv's
    # zero padding exactly (no-op for even dims, as in the test shape).
    pad_h, pad_w = H % 2, W % 2
    if pad_h or pad_w:
        x = jnp.pad(x, ((0, 0), (0, 0), (0, pad_h), (0, pad_w)))
    Hp, Wp = H + pad_h, W + pad_w
    Ho, Wo = Hp // STRIDE, Wp // STRIDE
    P = N * C                                    # fused batch*channel planes -> lanes

    # Single HBM relayout (pad fuses into it): split H/W into stride-2 phases and put
    # the fused planes on the lane dim.  In an NHWC-native pipeline this disappears.
    xr = x.reshape(N, C, Ho, 2, Wo, 2)
    xr = jnp.transpose(xr, (2, 3, 5, 4, 0, 1))   # (Ho, row_ph, col_ph, Wo, N, C)
    xr = xr.reshape(Ho, 4, Wo, P)

    cap = _vmem_capacity_bytes()
    budget = max(int(0.375 * cap), 16 * 2**20)
    PB, THo = _pick_tiles(P, Ho, Wo, itemsize, budget)
    n_p, n_h = P // PB, Ho // THo

    # v7x megacore: expose >= 2 parallel grid steps when the problem is big enough.
    if n_h * n_p < 2 and Ho % 2 == 0 and THo > 1 and \
            _step_vmem_bytes(Ho // 2, Wo, PB, itemsize) >= (2 << 20):
        THo = Ho // 2
        n_h = 2

    need = _step_vmem_bytes(THo, Wo, PB, itemsize)
    vmem_limit = int(min(max(need + (4 << 20), 32 << 20), int(0.85 * cap)))
    if vmem_limit < need:                        # oversized fallback tile: best effort
        vmem_limit = int(min(need + (2 << 20), cap))

    cost = pl.CostEstimate(
        flops=int(8 * Hp * Wp * P),
        transcendentals=int(Ho * Wo * P),
        bytes_accessed=int((Hp * Wp + Ho * Wo) * P * itemsize),
    )

    tho = THo                                    # captured by the halo index_map

    out = pl.pallas_call(
        _l2pool_kernel,
        out_shape=jax.ShapeDtypeStruct((Ho, Wo, P), x.dtype),
        grid_spec=pltpu.PrefetchScalarGridSpec(
            num_scalar_prefetch=0,
            grid=(n_h, n_p),
            in_specs=[
                # main block: THo output rows x all 4 phases x full W x PB planes
                pl.BlockSpec((THo, 4, Wo, PB), lambda h, p: (h, 0, 0, p)),
                # halo: odd-row phases of the row just above this H tile (clamped to
                # row 0 for tile 0 and masked to zero inside the kernel)
                pl.BlockSpec((None, 2, Wo, PB),
                             lambda h, p: (jnp.maximum(h * tho - 1, 0), 1, 0, p)),
            ],
            out_specs=pl.BlockSpec((THo, Wo, PB), lambda h, p: (h, 0, p)),
        ),
        compiler_params=pltpu.CompilerParams(
            dimension_semantics=("parallel", "parallel"),
            vmem_limit_bytes=vmem_limit,
        ),
        cost_estimate=cost,
    )(xr, xr)

    return jnp.transpose(out.reshape(Ho, Wo, N, C), (2, 3, 0, 1))   # back to NCHW


def _reference(x, filt):
    C = x.shape[1]
    out = jax.lax.conv_general_dilated(
        x * x, filt,
        window_strides=(STRIDE, STRIDE),
        padding=((PAD, PAD), (PAD, PAD)),
        dimension_numbers=("NCHW", "OIHW", "NCHW"),
        feature_group_count=C,
    )
    return jnp.sqrt(out + EPS)


if __name__ == "__main__":
    N, C, H, W = 2, 4, 16, 16
    key = jax.random.PRNGKey(0)
    x = jax.random.normal(key, (N, C, H, W), dtype=jnp.float32)

    l2pool = jax.jit(l2pooling)
    y = jax.block_until_ready(l2pool(x))
    y_ref = jax.block_until_ready(_reference(x, make_l2pool_filter(C)))

    assert y.shape == (N, C, H // 2, W // 2), y.shape
    np.testing.assert_allclose(np.asarray(y), np.asarray(y_ref), rtol=1e-5, atol=1e-6)

    print("KERNEL_OK")
</pallas_src>

<mosaic_0001>
module attributes {stable_mosaic.version = 11 : i64} {
  func.func @_l2pool_kernel(%arg0: i32, %arg1: i32, %arg2: memref<8x4x8x8xf32, #tpu.memory_space<vmem>>, %arg3: memref<1x2x8x8xf32, #tpu.memory_space<vmem>>, %arg4: memref<8x8x8xf32, #tpu.memory_space<vmem>>) attributes {dimension_semantics = [#tpu.dimension_semantics<parallel>, #tpu.dimension_semantics<parallel>], iteration_bounds = array<i64: 1, 1>, scalar_prefetch = 0 : i64, scratch_operands = 0 : i64, tpu.core_type = #tpu.core_type<tc>, window_params = [{transform_indices = @transform_0, window_bounds = array<i64: 8, 4, 8, 8>}, {transform_indices = @transform_1, window_bounds = array<i64: 1, 2, 8, 8>}, {transform_indices = @transform_2, window_bounds = array<i64: 8, 8, 8>}]} {
    %c0 = arith.constant 0 : index
    %c0_0 = arith.constant 0 : index
    %c0_1 = arith.constant 0 : index
    %c0_2 = arith.constant 0 : index
    %0 = vector.load %arg2[%c0, %c0_0, %c0_1, %c0_2] : memref<8x4x8x8xf32, #tpu.memory_space<vmem>>, vector<8x1x8x8xf32>
    %1 = vector.shape_cast %0 : vector<8x1x8x8xf32> to vector<8x8x8xf32>
    %c0_3 = arith.constant 0 : index
    %c1 = arith.constant 1 : index
    %c0_4 = arith.constant 0 : index
    %c0_5 = arith.constant 0 : index
    %2 = vector.load %arg2[%c0_3, %c1, %c0_4, %c0_5] : memref<8x4x8x8xf32, #tpu.memory_space<vmem>>, vector<8x1x8x8xf32>
    %3 = vector.shape_cast %2 : vector<8x1x8x8xf32> to vector<8x8x8xf32>
    %4 = arith.mulf %1, %1 : vector<8x8x8xf32>
    %5 = arith.mulf %3, %3 : vector<8x8x8xf32>
    %cst = arith.constant 2.500000e-01 : f32
    %6 = vector.broadcast %cst : f32 to vector<8x8x8xf32>
    %7 = arith.mulf %6, %5 : vector<8x8x8xf32>
    %8 = tpu.iota {dimensions = array<i32: 1>} : vector<8x8x8xi32>
    %c0_i32 = arith.constant 0 : i32
    %9 = vector.broadcast %c0_i32 : i32 to vector<8x8x8xi32>
    %10 = arith.cmpi eq, %8, %9 : vector<8x8x8xi32>
    %c1_i32 = arith.constant 1 : i32
    %11 = tpu.dynamic_rotate %7 by %c1_i32 dim 1 : vector<8x8x8xf32>, i32 -> vector<8x8x8xf32>
    %cst_6 = arith.constant 0.000000e+00 : f32
    %12 = vector.broadcast %cst_6 : f32 to vector<8x8x8xf32>
    %13 = arith.select %10, %12, %11 : vector<8x8x8xi1>, vector<8x8x8xf32>
    %cst_7 = arith.constant 5.000000e-01 : f32
    %14 = vector.broadcast %cst_7 : f32 to vector<8x8x8xf32>
    %15 = arith.mulf %14, %4 : vector<8x8x8xf32>
    %16 = arith.addf %15, %7 : vector<8x8x8xf32>
    %17 = arith.addf %16, %13 : vector<8x8x8xf32>
    %c0_8 = arith.constant 0 : index
    %c2 = arith.constant 2 : index
    %c0_9 = arith.constant 0 : index
    %c0_10 = arith.constant 0 : index
    %18 = vector.load %arg2[%c0_8, %c2, %c0_9, %c0_10] : memref<8x4x8x8xf32, #tpu.memory_space<vmem>>, vector<8x1x8x8xf32>
    %19 = vector.shape_cast %18 : vector<8x1x8x8xf32> to vector<8x8x8xf32>
    %c0_11 = arith.constant 0 : index
    %c3 = arith.constant 3 : index
    %c0_12 = arith.constant 0 : index
    %c0_13 = arith.constant 0 : index
    %20 = vector.load %arg2[%c0_11, %c3, %c0_12, %c0_13] : memref<8x4x8x8xf32, #tpu.memory_space<vmem>>, vector<8x1x8x8xf32>
    %21 = vector.shape_cast %20 : vector<8x1x8x8xf32> to vector<8x8x8xf32>
    %22 = arith.mulf %19, %19 : vector<8x8x8xf32>
    %23 = arith.mulf %21, %21 : vector<8x8x8xf32>
    %cst_14 = arith.constant 2.500000e-01 : f32
    %24 = vector.broadcast %cst_14 : f32 to vector<8x8x8xf32>
    %25 = arith.mulf %24, %23 : vector<8x8x8xf32>
    %26 = tpu.iota {dimensions = array<i32: 1>} : vector<8x8x8xi32>
    %c0_i32_15 = arith.constant 0 : i32
    %27 = vector.broadcast %c0_i32_15 : i32 to vector<8x8x8xi32>
    %28 = arith.cmpi eq, %26, %27 : vector<8x8x8xi32>
    %c1_i32_16 = arith.constant 1 : i32
    %29 = tpu.dynamic_rotate %25 by %c1_i32_16 dim 1 : vector<8x8x8xf32>, i32 -> vector<8x8x8xf32>
    %cst_17 = arith.constant 0.000000e+00 : f32
    %30 = vector.broadcast %cst_17 : f32 to vector<8x8x8xf32>
    %31 = arith.select %28, %30, %29 : vector<8x8x8xi1>, vector<8x8x8xf32>
    %cst_18 = arith.constant 5.000000e-01 : f32
    %32 = vector.broadcast %cst_18 : f32 to vector<8x8x8xf32>
    %33 = arith.mulf %32, %22 : vector<8x8x8xf32>
    %34 = arith.addf %33, %25 : vector<8x8x8xf32>
    %35 = arith.addf %34, %31 : vector<8x8x8xf32>
    %c0_19 = arith.constant 0 : index
    %c0_20 = arith.constant 0 : index
    %c0_21 = arith.constant 0 : index
    %c0_22 = arith.constant 0 : index
    %36 = vector.load %arg3[%c0_19, %c0_20, %c0_21, %c0_22] : memref<1x2x8x8xf32, #tpu.memory_space<vmem>>, vector<1x1x8x8xf32>
    %37 = vector.shape_cast %36 : vector<1x1x8x8xf32> to vector<8x8xf32>
    %c0_23 = arith.constant 0 : index
    %c1_24 = arith.constant 1 : index
    %c0_25 = arith.constant 0 : index
    %c0_26 = arith.constant 0 : index
    %38 = vector.load %arg3[%c0_23, %c1_24, %c0_25, %c0_26] : memref<1x2x8x8xf32, #tpu.memory_space<vmem>>, vector<1x1x8x8xf32>
    %39 = vector.shape_cast %38 : vector<1x1x8x8xf32> to vector<8x8xf32>
    %40 = arith.mulf %37, %37 : vector<8x8xf32>
    %41 = arith.mulf %39, %39 : vector<8x8xf32>
    %cst_27 = arith.constant 2.500000e-01 : f32
    %42 = vector.broadcast %cst_27 : f32 to vector<8x8xf32>
    %43 = arith.mulf %42, %41 : vector<8x8xf32>
    %44 = tpu.iota {dimensions = array<i32: 0>} : vector<8x8xi32>
    %c0_i32_28 = arith.constant 0 : i32
    %45 = vector.broadcast %c0_i32_28 : i32 to vector<8x8xi32>
    %46 = arith.cmpi eq, %44, %45 : vector<8x8xi32>
    %c1_i32_29 = arith.constant 1 : i32
    %47 = tpu.dynamic_rotate %43 by %c1_i32_29 dim 0 : vector<8x8xf32>, i32 -> vector<8x8xf32>
    %cst_30 = arith.constant 0.000000e+00 : f32
    %48 = vector.broadcast %cst_30 : f32 to vector<8x8xf32>
    %49 = arith.select %46, %48, %47 : vector<8x8xi1>, vector<8x8xf32>
    %cst_31 = arith.constant 5.000000e-01 : f32
    %50 = vector.broadcast %cst_31 : f32 to vector<8x8xf32>
    %51 = arith.mulf %50, %40 : vector<8x8xf32>
    %52 = arith.addf %51, %43 : vector<8x8xf32>
    %53 = arith.addf %52, %49 : vector<8x8xf32>
    %c0_i32_32 = arith.constant 0 : i32
    %54 = arith.cmpi sgt, %arg0, %c0_i32_32 : i32
    %55 = arith.extui %54 : i1 to i32
    %56 = arith.sitofp %55 : i32 to f32
    %57 = vector.broadcast %56 : f32 to vector<8x8xf32>
    %58 = arith.mulf %53, %57 : vector<8x8xf32>
    %59 = vector.shape_cast %58 : vector<8x8xf32> to vector<1x8x8xf32>
    %60 = vector.extract_strided_slice %35 {offsets = [0, 0, 0], sizes = [7, 8, 8], strides = [1, 1, 1]} : vector<8x8x8xf32> to vector<7x8x8xf32>
    %61 = tpu.concatenate %59, %60 in 0 : vector<1x8x8xf32>, vector<7x8x8xf32> -> vector<8x8x8xf32>
    %cst_33 = arith.constant 5.000000e-01 : f32
    %62 = vector.broadcast %cst_33 : f32 to vector<8x8x8xf32>
    %63 = arith.mulf %62, %17 : vector<8x8x8xf32>
    %64 = arith.addf %35, %61 : vector<8x8x8xf32>
    %cst_34 = arith.constant 2.500000e-01 : f32
    %65 = vector.broadcast %cst_34 : f32 to vector<8x8x8xf32>
    %66 = arith.mulf %65, %64 : vector<8x8x8xf32>
    %67 = arith.addf %63, %66 : vector<8x8x8xf32>
    %cst_35 = arith.constant 9.99999996E-13 : f32
    %68 = vector.broadcast %cst_35 : f32 to vector<8x8x8xf32>
    %69 = arith.addf %67, %68 : vector<8x8x8xf32>
    %70 = math.sqrt %69 : vector<8x8x8xf32>
    %c0_36 = arith.constant 0 : index
    %c0_37 = arith.constant 0 : index
    %c0_38 = arith.constant 0 : index
    %71 = vector.load %arg4[%c0_36, %c0_37, %c0_38] : memref<8x8x8xf32, #tpu.memory_space<vmem>>, vector<8x8x8xf32>
    tpu.vector_store %arg4[%c0_36, %c0_37, %c0_38], %70 {strides = array<i32>} : memref<8x8x8xf32, #tpu.memory_space<vmem>>, vector<8x8x8xf32>,
    return
  }
  func.func @transform_0(%arg0: i32, %arg1: i32) -> (i32, i32, i32, i32) {
    %c0_i32 = arith.constant 0 : i32
    %c0_i32_0 = arith.constant 0 : i32
    %c0_i32_1 = arith.constant 0 : i32
    return %arg0, %c0_i32, %c0_i32_0, %arg1 : i32, i32, i32, i32
  }
  func.func @transform_1(%arg0: i32, %arg1: i32) -> (i32, i32, i32, i32) {
    %c8_i32 = arith.constant 8 : i32
    %0 = arith.muli %arg0, %c8_i32 : i32
    %c1_i32 = arith.constant 1 : i32
    %1 = arith.subi %0, %c1_i32 : i32
    %c0_i32 = arith.constant 0 : i32
    %2 = arith.maxsi %1, %c0_i32 : i32
    %c1_i32_0 = arith.constant 1 : i32
    %c0_i32_1 = arith.constant 0 : i32
    %c0_i32_2 = arith.constant 0 : i32
    return %2, %c1_i32_0, %c0_i32_1, %arg1 : i32, i32, i32, i32
  }
  func.func @transform_2(%arg0: i32, %arg1: i32) -> (i32, i32, i32) {
    %c0_i32 = arith.constant 0 : i32
    %c0_i32_0 = arith.constant 0 : i32
    return %arg0, %c0_i32, %arg1 : i32, i32, i32
  }
}

</mosaic_0001>

<llo_original>
// kernel: l2pooling.1
$region0: #{l2pooling.1}
  #allocation0 [shape = 'u32[]', space=smem, size = 0x4, offset = 0x4, fixed_abs, tag = 'smem constant byte address 0x4 - core index']
  #allocation1 [shape = 'u32[144,128]{1,0:T(1,128)}', space=vmem, size = 0x12000, scoped, tag = 'internal scratch']
  %s0 = inlined_call_operand.vmem [shape: f32[8,4,8,8], index: 0, kind: input, shape index: {}, may-alias: {0,1}]
  %s1 = inlined_call_operand.vmem [shape: f32[8,4,8,8], index: 1, kind: input, shape index: {}, may-alias: {0,1}]
  %s2 = inlined_call_operand.vmem [shape: f32[8,8,8], index: 2, kind: output, shape index: {}]
  %s3 = sld [smem:[#allocation0]]
  $region18: #{l2pooling.1} parent=0
    _
  %s5 = ssub.s32 1, %s3
  %s6 = scalar_select 0, %s5, %s3
  // Predicated region
  $region2: #{l2pooling.1} parent=0 // pred_check
    _
  $region3: #{l2pooling.1} parent=0 // pred_check_branch
    %8 = sbr.rel (0) target = $region5
  $region4: #{l2pooling.1} parent=0 // pred_region
    _
  $region5: #{l2pooling.1} parent=0 // pred_fallthru
    _
  // Predicated region
  $region6: #{l2pooling.1} parent=0 // pred_check
    _
  $region7: #{l2pooling.1} parent=0 // pred_check_branch
    %10 = sbr.rel (0) target = $region9
  $region8: #{l2pooling.1} parent=0 // pred_region
    %s11 = smul.u32 0, 8
    %s12 = ssub.s32 %s11, 1
    %p13 = scmp.gt.s32.totalorder %s12, 0
    %s14 = scalar_select %p13, %s12, 0
    %p15 = scmp.lt.s32.totalorder %s14, 7
    %s16 = scalar_select %p15, %s14, 7
    %s17 = smul.addr %s16, 4
    %s18 = sadd.s32 2, %s17
    %s19 = smul.addr %s18, 8
    %s20 = scalar_lea.vmem %s1, %s19
    %s21 = smul.u32 0, 8
    %s22 = ssub.s32 %s21, 1
    %p23 = scmp.gt.s32.totalorder %s22, 0
    %s24 = scalar_select %p23, %s22, 0
  $region9: #{l2pooling.1} parent=0 // pred_fallthru
    _
  %s25 = smul.u32 0, 8
  %s26 = ssub.s32 %s25, 1
  %p27 = scmp.gt.s32.totalorder %s26, 0
  %s28 = scalar_select %p27, %s26, 0
  %p29 = scmp.lt.s32.totalorder %s28, 7
  %s30 = scalar_select %p29, %s28, 7
  %s31 = smul.addr %s30, 4
  %s32 = sadd.s32 2, %s31
  %s33 = smul.addr %s32, 8
  %s34 = scalar_lea.vmem %s1, %s33
  %s35 = smul.u32 0, 8
  %s36 = ssub.s32 %s35, 1
  %p37 = scmp.gt.s32.totalorder %s36, 0
  %s38 = scalar_select %p37, %s36, 0
  %p39 = scmp.lt.s32.totalorder %s38, 7
  %s40 = scalar_select %p39, %s38, 7
  %s41 = smul.addr %s40, 4
  %s42 = sadd.s32 2, %s41
  %s43 = smul.addr %s42, 8
  %s44 = scalar_lea.vmem %s1, %s43
  %s45 = smul.u32 0, 8
  %s46 = ssub.s32 %s45, 1
  %p47 = scmp.gt.s32.totalorder %s46, 0
  %s48 = scalar_select %p47, %s46, 0
  %v49 = vld [vmem:[%s0] sm:$0xff]
  %v50 = vld [vmem:[%s0 + $0x20] sm:$0xff]
  %v51 = vld [vmem:[%s0 + $0x40] sm:$0xff]
  %v52 = vld [vmem:[%s0 + $0x60] sm:$0xff]
  %v53 = vld [vmem:[%s0 + $0x80] sm:$0xff]
  %v54 = vld [vmem:[%s0 + $0xa0] sm:$0xff]
  %v55 = vld [vmem:[%s0 + $0xc0] sm:$0xff]
  %v56 = vld [vmem:[%s0 + $0xe0] sm:$0xff]
  %s57 = scalar_lea.vmem %s0, 8
  %v58 = vld [vmem:[%s57] sm:$0xff]
  %v59 = vld [vmem:[%s57 + $0x20] sm:$0xff]
  %v60 = vld [vmem:[%s57 + $0x40] sm:$0xff]
  %v61 = vld [vmem:[%s57 + $0x60] sm:$0xff]
  %v62 = vld [vmem:[%s57 + $0x80] sm:$0xff]
  %v63 = vld [vmem:[%s57 + $0xa0] sm:$0xff]
  %v64 = vld [vmem:[%s57 + $0xc0] sm:$0xff]
  %v65 = vld [vmem:[%s57 + $0xe0] sm:$0xff]
  %v66 = vmul.f32 %v49, %v49
  %v67 = vmul.f32 %v50, %v50
  %v68 = vmul.f32 %v51, %v51
  %v69 = vmul.f32 %v52, %v52
  %v70 = vmul.f32 %v53, %v53
  %v71 = vmul.f32 %v54, %v54
  %v72 = vmul.f32 %v55, %v55
  %v73 = vmul.f32 %v56, %v56
  %v74 = vmul.f32 %v58, %v58
  %v75 = vmul.f32 %v59, %v59
  %v76 = vmul.f32 %v60, %v60
  %v77 = vmul.f32 %v61, %v61
  %v78 = vmul.f32 %v62, %v62
  %v79 = vmul.f32 %v63, %v63
  %v80 = vmul.f32 %v64, %v64
  %v81 = vmul.f32 %v65, %v65
  %v82 = vmul.f32 %v74, 0.25
  %v83 = vmul.f32 %v75, 0.25
  %v84 = vmul.f32 %v76, 0.25
  %v85 = vmul.f32 %v77, 0.25
  %v86 = vmul.f32 %v78, 0.25
  %v87 = vmul.f32 %v79, 0.25
  %v88 = vmul.f32 %v80, 0.25
  %v89 = vmul.f32 %v81, 0.25
  %v90 = vlaneseq
  %v91 = vshrl.u32 %v90, 7
  %vm92 = vcmp.eq.s32.totalorder %v91, 0
  %v93 = vrot.slane %v82, 7
  %v94 = vrot.slane %v83, 7
  %v95 = vrot.slane %v84, 7
  %v96 = vrot.slane %v85, 7
  %v97 = vrot.slane %v86, 7
  %v98 = vrot.slane %v87, 7
  %v99 = vrot.slane %v88, 7
  %v100 = vrot.slane %v89, 7
  %v101 = vsel %vm92, 0.0, %v93
  %v102 = vsel %vm92, 0.0, %v94
  %v103 = vsel %vm92, 0.0, %v95
  %v104 = vsel %vm92, 0.0, %v96
  %v105 = vsel %vm92, 0.0, %v97
  %v106 = vsel %vm92, 0.0, %v98
  %v107 = vsel %vm92, 0.0, %v99
  %v108 = vsel %vm92, 0.0, %v100
  %v109 = vmul.f32 %v66, 0.5
  %v110 = vmul.f32 %v67, 0.5
  %v111 = vmul.f32 %v68, 0.5
  %v112 = vmul.f32 %v69, 0.5
  %v113 = vmul.f32 %v70, 0.5
  %v114 = vmul.f32 %v71, 0.5
  %v115 = vmul.f32 %v72, 0.5
  %v116 = vmul.f32 %v73, 0.5
  %v117 = vadd.f32 %v109, %v82
  %v118 = vadd.f32 %v110, %v83
  %v119 = vadd.f32 %v111, %v84
  %v120 = vadd.f32 %v112, %v85
  %v121 = vadd.f32 %v113, %v86
  %v122 = vadd.f32 %v114, %v87
  %v123 = vadd.f32 %v115, %v88
  %v124 = vadd.f32 %v116, %v89
  %v125 = vadd.f32 %v117, %v101
  %v126 = vadd.f32 %v118, %v102
  %v127 = vadd.f32 %v119, %v103
  %v128 = vadd.f32 %v120, %v104
  %v129 = vadd.f32 %v121, %v105
  %v130 = vadd.f32 %v122, %v106
  %v131 = vadd.f32 %v123, %v107
  %v132 = vadd.f32 %v124, %v108
  %s133 = scalar_lea.vmem %s0, 16
  %v134 = vld [vmem:[%s133] sm:$0xff]
  %v135 = vld [vmem:[%s133 + $0x20] sm:$0xff]
  %v136 = vld [vmem:[%s133 + $0x40] sm:$0xff]
  %v137 = vld [vmem:[%s133 + $0x60] sm:$0xff]
  %v138 = vld [vmem:[%s133 + $0x80] sm:$0xff]
  %v139 = vld [vmem:[%s133 + $0xa0] sm:$0xff]
  %v140 = vld [vmem:[%s133 + $0xc0] sm:$0xff]
  %v141 = vld [vmem:[%s133 + $0xe0] sm:$0xff]
  %s142 = scalar_lea.vmem %s0, 24
  %v143 = vld [vmem:[%s142] sm:$0xff]
  %v144 = vld [vmem:[%s142 + $0x20] sm:$0xff]
  %v145 = vld [vmem:[%s142 + $0x40] sm:$0xff]
  %v146 = vld [vmem:[%s142 + $0x60] sm:$0xff]
  %v147 = vld [vmem:[%s142 + $0x80] sm:$0xff]
  %v148 = vld [vmem:[%s142 + $0xa0] sm:$0xff]
  %v149 = vld [vmem:[%s142 + $0xc0] sm:$0xff]
  %v150 = vld [vmem:[%s142 + $0xe0] sm:$0xff]
  %v151 = vmul.f32 %v134, %v134
  %v152 = vmul.f32 %v135, %v135
  %v153 = vmul.f32 %v136, %v136
  %v154 = vmul.f32 %v137, %v137
  %v155 = vmul.f32 %v138, %v138
  %v156 = vmul.f32 %v139, %v139
  %v157 = vmul.f32 %v140, %v140
  %v158 = vmul.f32 %v141, %v141
  %v159 = vmul.f32 %v143, %v143
  %v160 = vmul.f32 %v144, %v144
  %v161 = vmul.f32 %v145, %v145
  %v162 = vmul.f32 %v146, %v146
  %v163 = vmul.f32 %v147, %v147
  %v164 = vmul.f32 %v148, %v148
  %v165 = vmul.f32 %v149, %v149
  %v166 = vmul.f32 %v150, %v150
  %v167 = vmul.f32 %v159, 0.25
  %v168 = vmul.f32 %v160, 0.25
  %v169 = vmul.f32 %v161, 0.25
  %v170 = vmul.f32 %v162, 0.25
  %v171 = vmul.f32 %v163, 0.25
  %v172 = vmul.f32 %v164, 0.25
  %v173 = vmul.f32 %v165, 0.25
  %v174 = vmul.f32 %v166, 0.25
  %v175 = vrot.slane %v167, 7
  %v176 = vrot.slane %v168, 7
  %v177 = vrot.slane %v169, 7
  %v178 = vrot.slane %v170, 7
  %v179 = vrot.slane %v171, 7
  %v180 = vrot.slane %v172, 7
  %v181 = vrot.slane %v173, 7
  %v182 = vrot.slane %v174, 7
  %v183 = vsel %vm92, 0.0, %v175
  %v184 = vsel %vm92, 0.0, %v176
  %v185 = vsel %vm92, 0.0, %v177
  %v186 = vsel %vm92, 0.0, %v178
  %v187 = vsel %vm92, 0.0, %v179
  %v188 = vsel %vm92, 0.0, %v180
  %v189 = vsel %vm92, 0.0, %v181
  %v190 = vsel %vm92, 0.0, %v182
  %v191 = vmul.f32 %v151, 0.5
  %v192 = vmul.f32 %v152, 0.5
  %v193 = vmul.f32 %v153, 0.5
  %v194 = vmul.f32 %v154, 0.5
  %v195 = vmul.f32 %v155, 0.5
  %v196 = vmul.f32 %v156, 0.5
  %v197 = vmul.f32 %v157, 0.5
  %v198 = vmul.f32 %v158, 0.5
  %v199 = vadd.f32 %v191, %v167
  %v200 = vadd.f32 %v192, %v168
  %v201 = vadd.f32 %v193, %v169
  %v202 = vadd.f32 %v194, %v170
  %v203 = vadd.f32 %v195, %v171
  %v204 = vadd.f32 %v196, %v172
  %v205 = vadd.f32 %v197, %v173
  %v206 = vadd.f32 %v198, %v174
  %v207 = vadd.f32 %v199, %v183
  %v208 = vadd.f32 %v200, %v184
  %v209 = vadd.f32 %v201, %v185
  %v210 = vadd.f32 %v202, %v186
  %v211 = vadd.f32 %v203, %v187
  %v212 = vadd.f32 %v204, %v188
  %v213 = vadd.f32 %v205, %v189
  %v214 = vadd.f32 %v206, %v190
  %v215 = vld [vmem:[%s44] sm:$0xff]
  %s216 = scalar_lea.vmem %s44, 8
  %v217 = vld [vmem:[%s216] sm:$0xff]
  %v218 = vmul.f32 %v215, %v215
  %v219 = vmul.f32 %v217, %v217
  %v220 = vmul.f32 %v219, 0.25
  %v221 = vrot.slane %v220, 7
  %v222 = vsel %vm92, 0.0, %v221
  %v223 = vmul.f32 %v218, 0.5
  %v224 = vadd.f32 %v223, %v220
  %v225 = vadd.f32 %v224, %v222
  %p226 = scmp.gt.s32.totalorder 0, 0
  %s227 = scalar_select %p226, 1, 0
  %s228 = scvt.s32.f32 %s227
  %v229 = vstv %s228
  %v230 = vmul.f32 %v225, %v229
  %v231 = vmul.f32 %v125, 0.5
  %v232 = vmul.f32 %v126, 0.5
  %v233 = vmul.f32 %v127, 0.5
  %v234 = vmul.f32 %v128, 0.5
  %v235 = vmul.f32 %v129, 0.5
  %v236 = vmul.f32 %v130, 0.5
  %v237 = vmul.f32 %v131, 0.5
  %v238 = vmul.f32 %v132, 0.5
  %v239 = vadd.f32 %v207, %v230
  %v240 = vadd.f32 %v208, %v207
  %v241 = vadd.f32 %v209, %v208
  %v242 = vadd.f32 %v210, %v209
  %v243 = vadd.f32 %v211, %v210
  %v244 = vadd.f32 %v212, %v211
  %v245 = vadd.f32 %v213, %v212
  %v246 = vadd.f32 %v214, %v213
  %v247 = vmul.f32 %v239, 0.25
  %v248 = vmul.f32 %v240, 0.25
  %v249 = vmul.f32 %v241, 0.25
  %v250 = vmul.f32 %v242, 0.25
  %v251 = vmul.f32 %v243, 0.25
  %v252 = vmul.f32 %v244, 0.25
  %v253 = vmul.f32 %v245, 0.25
  %v254 = vmul.f32 %v246, 0.25
  %v255 = vadd.f32 %v231, %v247
  %v256 = vadd.f32 %v232, %v248
  %v257 = vadd.f32 %v233, %v249
  %v258 = vadd.f32 %v234, %v250
  %v259 = vadd.f32 %v235, %v251
  %v260 = vadd.f32 %v236, %v252
  %v261 = vadd.f32 %v237, %v253
  %v262 = vadd.f32 %v238, %v254
  %v263 = vadd.f32 %v255, 1e-12
  %v264 = vadd.f32 %v256, 1e-12
  %v265 = vadd.f32 %v257, 1e-12
  %v266 = vadd.f32 %v258, 1e-12
  %v267 = vadd.f32 %v259, 1e-12
  %v268 = vadd.f32 %v260, 1e-12
  %v269 = vadd.f32 %v261, 1e-12
  %v270 = vadd.f32 %v262, 1e-12
  %v271 = vrsqrt.pop %v263
  %v272 = vmul.f32 %v263, %v271
  %vm273 = vcmp.eq.f32.partialorder %v263, inf
  %v274 = vsel %vm273, %v263, %v272
  %vm275 = vcmp.eq.f32.partialorder %v263, 0.0
  %v276 = vand.u32 %v263, 2147483648
  %v277 = vsel %vm275, %v276, %v274
  %v278 = vrsqrt.pop %v264
  %v279 = vmul.f32 %v264, %v278
  %vm280 = vcmp.eq.f32.partialorder %v264, inf
  %v281 = vsel %vm280, %v264, %v279
  %vm282 = vcmp.eq.f32.partialorder %v264, 0.0
  %v283 = vand.u32 %v264, 2147483648
  %v284 = vsel %vm282, %v283, %v281
  %v285 = vrsqrt.pop %v265
  %v286 = vmul.f32 %v265, %v285
  %vm287 = vcmp.eq.f32.partialorder %v265, inf
  %v288 = vsel %vm287, %v265, %v286
  %vm289 = vcmp.eq.f32.partialorder %v265, 0.0
  %v290 = vand.u32 %v265, 2147483648
  %v291 = vsel %vm289, %v290, %v288
  %v292 = vrsqrt.pop %v266
  %v293 = vmul.f32 %v266, %v292
  %vm294 = vcmp.eq.f32.partialorder %v266, inf
  %v295 = vsel %vm294, %v266, %v293
  %vm296 = vcmp.eq.f32.partialorder %v266, 0.0
  %v297 = vand.u32 %v266, 2147483648
  %v298 = vsel %vm296, %v297, %v295
  %v299 = vrsqrt.pop %v267
  %v300 = vmul.f32 %v267, %v299
  %vm301 = vcmp.eq.f32.partialorder %v267, inf
  %v302 = vsel %vm301, %v267, %v300
  %vm303 = vcmp.eq.f32.partialorder %v267, 0.0
  %v304 = vand.u32 %v267, 2147483648
  %v305 = vsel %vm303, %v304, %v302
  %v306 = vrsqrt.pop %v268
  %v307 = vmul.f32 %v268, %v306
  %vm308 = vcmp.eq.f32.partialorder %v268, inf
  %v309 = vsel %vm308, %v268, %v307
  %vm310 = vcmp.eq.f32.partialorder %v268, 0.0
  %v311 = vand.u32 %v268, 2147483648
  %v312 = vsel %vm310, %v311, %v309
  %v313 = vrsqrt.pop %v269
  %v314 = vmul.f32 %v269, %v313
  %vm315 = vcmp.eq.f32.partialorder %v269, inf
  %v316 = vsel %vm315, %v269, %v314
  %vm317 = vcmp.eq.f32.partialorder %v269, 0.0
  %v318 = vand.u32 %v269, 2147483648
  %v319 = vsel %vm317, %v318, %v316
  %v320 = vrsqrt.pop %v270
  %v321 = vmul.f32 %v270, %v320
  %vm322 = vcmp.eq.f32.partialorder %v270, inf
  %v323 = vsel %vm322, %v270, %v321
  %vm324 = vcmp.eq.f32.partialorder %v270, 0.0
  %v325 = vand.u32 %v270, 2147483648
  %v326 = vsel %vm324, %v325, %v323
  %vm327 = vcmask 64512
  %328 = vst.msk [vmem:[%s2] sm:$0xff] %vm327, %v277
  %329 = vst.msk [vmem:[%s2 + $0x8] sm:$0xff] %vm327, %v284
  %330 = vst.msk [vmem:[%s2 + $0x10] sm:$0xff] %vm327, %v291
  %331 = vst.msk [vmem:[%s2 + $0x18] sm:$0xff] %vm327, %v298
  %332 = vst.msk [vmem:[%s2 + $0x20] sm:$0xff] %vm327, %v305
  %333 = vst.msk [vmem:[%s2 + $0x28] sm:$0xff] %vm327, %v312
  %334 = vst.msk [vmem:[%s2 + $0x30] sm:$0xff] %vm327, %v319
  %335 = vst.msk [vmem:[%s2 + $0x38] sm:$0xff] %vm327, %v326
  // Predicated region
  $region10: #{l2pooling.1} parent=0 // pred_check
    _
  $region11: #{l2pooling.1} parent=0 // pred_check_branch
    %337 = sbr.rel (0) target = $region13
  $region12: #{l2pooling.1} parent=0 // pred_region
    _
  $region13: #{l2pooling.1} parent=0 // pred_fallthru
    _
  // Predicated region
  $region14: #{l2pooling.1} parent=0 // pred_check
    _
  $region15: #{l2pooling.1} parent=0 // pred_check_branch
    %339 = sbr.rel (0) target = $region17
  $region16: #{l2pooling.1} parent=0 // pred_region
    _
  $region17: #{l2pooling.1} parent=0 // pred_fallthru
    _

</llo_original>
